<compile_context>
chip_gen: v7x
topology: tpu7x:2x2x1
jax: 0.10.0
libtpu: 0.0.40
codegen_flags: <defaults>
</compile_context>

<pallas_src>
import jax
import jax.numpy as jnp
from jax.experimental import pallas as pl
from jax.experimental.pallas import tpu as pltpu

_ALIGN = 16  # row-offset alignment in the packed buffer (covers f32 & bf16 sublane tiling)


def _round_up(n, m):
    return (n + m - 1) // m * m


def pack_fc_sub_params(w1, b1, w2, b2, dtype=jnp.float32):
    """Pack w1:(Din,H), b1:(H,), w2:(H,Dout), b2:(Dout,) into one buffer so
    the kernel needs a single parameter DMA.

    Row layout (all row offsets are multiples of 16 so in-kernel slices stay
    sublane-tile aligned for both f32 and bf16):
      rows [0, Din)             : w1  (cols 0:H)
      row  r_b1                 : b1  (cols 0:H)
      rows [r_w2, r_w2 + H)     : w2  (cols 0:Dout)   <- no lane/row padding of H
      row  r_b2                 : b2  (cols 0:Dout)
    """
    din, h = w1.shape
    h2, dout = w2.shape
    assert h2 == h and b1.shape == (h,) and b2.shape == (dout,)

    width = max(h, dout)
    r_b1 = _round_up(din, _ALIGN)
    r_w2 = r_b1 + _ALIGN
    r_b2 = r_w2 + _round_up(h, _ALIGN)
    n_rows = r_b2 + _ALIGN

    buf = jnp.zeros((n_rows, width), dtype)
    buf = buf.at[0:din, 0:h].set(w1.astype(dtype))
    buf = buf.at[r_b1, 0:h].set(b1.astype(dtype))
    buf = buf.at[r_w2:r_w2 + h, 0:dout].set(w2.astype(dtype))
    buf = buf.at[r_b2, 0:dout].set(b2.astype(dtype))

    layout = dict(din=din, h=h, dout=dout, r_b1=r_b1, r_w2=r_w2, r_b2=r_b2)
    return buf, layout


def _make_fc_sub_kernel(layout, compute_dtype):
    din, h, dout = layout["din"], layout["h"], layout["dout"]
    r_b1, r_w2, r_b2 = layout["r_b1"], layout["r_w2"], layout["r_b2"]
    compute_dtype = jnp.dtype(compute_dtype)
    # Full-precision MXU passes when computing in f32 (matches the f32 PyTorch
    # module); single-pass bf16 when the packed params are bf16 (v5e fast path).
    prec = (jax.lax.Precision.HIGHEST if compute_dtype == jnp.float32
            else jax.lax.Precision.DEFAULT)

    def kernel(x_ref, p_ref, o_ref):
        # Static, tile-aligned slices of the single packed-parameter ref.
        w1 = p_ref[0:din, 0:h]                              # (Din, H)
        b1 = p_ref[r_b1:r_b1 + 1, 0:h].astype(jnp.float32)  # (1, H)
        w2 = p_ref[r_w2:r_w2 + h, 0:dout]                   # (H, Dout)
        b2 = p_ref[r_b2:r_b2 + 1, 0:dout].astype(jnp.float32)

        x = x_ref[...].astype(compute_dtype)
        hid = jnp.tanh(
            jnp.dot(x, w1, preferred_element_type=jnp.float32, precision=prec)
            + b1)
        out = jnp.dot(hid.astype(compute_dtype), w2,
                      preferred_element_type=jnp.float32, precision=prec) + b2
        o_ref[...] = out.astype(o_ref.dtype)   # unpadded (tile_b, Dout) store

    return kernel


def fc_sub_forward(x, packed_params, layout, *, block_b=2048,
                   min_grid_steps=8, gridless_max_batch=4096):
    """x: (B, Din) -> (B, Dout). packed_params/layout from pack_fc_sub_params."""
    B, din = x.shape
    assert din == layout["din"]
    dout = layout["dout"]
    n_rows, width = packed_params.shape
    kernel = _make_fc_sub_kernel(layout, packed_params.dtype)

    if B <= gridless_max_batch:
        # Small batch: grid-less call, whole operands as single VMEM blocks.
        # No pipeline prologue/epilogue; 2 input DMAs + 1 output DMA.
        return pl.pallas_call(
            kernel,
            out_shape=jax.ShapeDtypeStruct((B, dout), x.dtype),
            in_specs=[pl.BlockSpec(memory_space=pltpu.MemorySpace.VMEM),
                      pl.BlockSpec(memory_space=pltpu.MemorySpace.VMEM)],
            out_specs=pl.BlockSpec(memory_space=pltpu.MemorySpace.VMEM),
        )(x, packed_params)

    # Large batch: tile the batch with a "parallel" grid axis.  Pick the tile
    # so the grid has at least `min_grid_steps` steps (>= ~4 per v7x
    # TensorCore so double-buffering can hide the DMAs), capped at block_b.
    bb = max(256, min(block_b, _round_up(pl.cdiv(B, min_grid_steps), 256)))
    pad = (-B) % bb
    x_in = jnp.pad(x, ((0, pad), (0, 0))) if pad else x
    bp = B + pad

    out = pl.pallas_call(
        kernel,
        out_shape=jax.ShapeDtypeStruct((bp, dout), x.dtype),
        grid=(bp // bb,),
        in_specs=[
            pl.BlockSpec((bb, din), lambda i: (i, 0)),
            # Constant block index -> packed params stay VMEM-resident.
            pl.BlockSpec((n_rows, width), lambda i: (0, 0)),
        ],
        out_specs=pl.BlockSpec((bb, dout), lambda i: (i, 0)),
        compiler_params=pltpu.CompilerParams(
            dimension_semantics=("parallel",)),
    )(x_in, packed_params)

    return out[:B] if pad else out


def init_linear_params(key, in_features, out_features, dtype=jnp.float32):
    # Deterministic init mimicking torch.nn.Linear: U(-1/sqrt(fan_in), 1/sqrt(fan_in)).
    kw, kb = jax.random.split(key)
    bound = 1.0 / jnp.sqrt(jnp.asarray(in_features, dtype))
    # Stored already transposed to (in, out) for the kernel's x @ W convention.
    w = jax.random.uniform(kw, (in_features, out_features), dtype,
                           minval=-bound, maxval=bound)
    b = jax.random.uniform(kb, (out_features,), dtype,
                           minval=-bound, maxval=bound)
    return w, b


def fc_sub_reference(x, w1, b1, w2, b2):
    hp = jax.lax.Precision.HIGHEST
    hid = jnp.tanh(jnp.dot(x, w1, precision=hp) + b1)
    return jnp.dot(hid, w2, precision=hp) + b2


if __name__ == "__main__":
    # FC_sub(input_dim=32, hidden_dim=64, output_dim=16), batch of 8.
    batch, input_dim, hidden_dim, output_dim = 8, 32, 64, 16

    key = jax.random.PRNGKey(0)
    kx, k1, k2, kbig, kodd = jax.random.split(key, 5)

    x = jax.random.normal(kx, (batch, input_dim), jnp.float32)
    w1, b1 = init_linear_params(k1, input_dim, hidden_dim)
    w2, b2 = init_linear_params(k2, hidden_dim, output_dim)

    # Pack parameters once (as a real model would at init time).
    packed, layout = pack_fc_sub_params(w1, b1, w2, b2)

    # 1) Small-batch (grid-less) path.
    out = jax.block_until_ready(fc_sub_forward(x, packed, layout))
    ref = fc_sub_reference(x, w1, b1, w2, b2)
    assert out.shape == (batch, output_dim)
    assert jnp.allclose(out, ref, atol=1e-4, rtol=1e-4)

    # 2) Batch-tiled ("parallel" grid) path, tile-divisible batch.
    x_big = jax.random.normal(kbig, (4608, input_dim), jnp.float32)
    out_big = jax.block_until_ready(fc_sub_forward(x_big, packed, layout))
    ref_big = fc_sub_reference(x_big, w1, b1, w2, b2)
    assert out_big.shape == (4608, output_dim)
    assert jnp.allclose(out_big, ref_big, atol=1e-4, rtol=1e-4)

    # 3) Batch-tiled path with a batch that does NOT divide the tile
    #    (exercises the cdiv grid + padding branch).
    x_odd = jax.random.normal(kodd, (5000, input_dim), jnp.float32)
    out_odd = jax.block_until_ready(fc_sub_forward(x_odd, packed, layout))
    ref_odd = fc_sub_reference(x_odd, w1, b1, w2, b2)
    assert out_odd.shape == (5000, output_dim)
    assert jnp.allclose(out_odd, ref_odd, atol=1e-4, rtol=1e-4)

    # 4) Optional bf16-MXU path (v5e-oriented); looser tolerance for bf16.
    packed16, layout16 = pack_fc_sub_params(w1, b1, w2, b2, dtype=jnp.bfloat16)
    out16 = jax.block_until_ready(fc_sub_forward(x, packed16, layout16))
    assert out16.shape == (batch, output_dim)
    assert jnp.allclose(out16, ref, atol=5e-2, rtol=5e-2)

    print("KERNEL_OK")
</pallas_src>

<mosaic_0001>
module attributes {stable_mosaic.version = 11 : i64} {
  func.func @kernel(%arg0: memref<8x32xf32, #tpu.memory_space<vmem>>, %arg1: memref<128x64xf32, #tpu.memory_space<vmem>>, %arg2: memref<8x16xf32, #tpu.memory_space<vmem>>) attributes {dimension_semantics = [], scalar_prefetch = 0 : i64, scratch_operands = 0 : i64, tpu.core_type = #tpu.core_type<tc>} {
    %c0 = arith.constant 0 : index
    %c0_0 = arith.constant 0 : index
    %0 = vector.load %arg1[%c0, %c0_0] : memref<128x64xf32, #tpu.memory_space<vmem>>, vector<32x64xf32>
    %c32 = arith.constant 32 : index
    %c0_1 = arith.constant 0 : index
    %1 = vector.load %arg1[%c32, %c0_1] : memref<128x64xf32, #tpu.memory_space<vmem>>, vector<1x64xf32>
    %c48 = arith.constant 48 : index
    %c0_2 = arith.constant 0 : index
    %2 = vector.load %arg1[%c48, %c0_2] : memref<128x64xf32, #tpu.memory_space<vmem>>, vector<64x16xf32>
    %c112 = arith.constant 112 : index
    %c0_3 = arith.constant 0 : index
    %3 = vector.load %arg1[%c112, %c0_3] : memref<128x64xf32, #tpu.memory_space<vmem>>, vector<1x16xf32>
    %c0_4 = arith.constant 0 : index
    %c0_5 = arith.constant 0 : index
    %4 = vector.load %arg0[%c0_4, %c0_5] : memref<8x32xf32, #tpu.memory_space<vmem>>, vector<8x32xf32>
    %cst = arith.constant dense<0.000000e+00> : vector<8x64xf32>
    %5 = tpu.matmul %4, %0, %cst {dimension_numbers = #tpu.dot_dimension_numbers<[1], [0], [0], [1], [0, 0, 1, 1], [], []>, precision = #tpu.contract_precision<fp32>} : vector<8x32xf32>, vector<32x64xf32>, vector<8x64xf32> -> vector<8x64xf32>
    %6 = vector.broadcast %1 : vector<1x64xf32> to vector<8x64xf32>
    %7 = arith.addf %5, %6 : vector<8x64xf32>
    %8 = math.tanh %7 : vector<8x64xf32>
    %cst_6 = arith.constant dense<0.000000e+00> : vector<8x16xf32>
    %9 = tpu.matmul %8, %2, %cst_6 {dimension_numbers = #tpu.dot_dimension_numbers<[1], [0], [0], [1], [0, 0, 1, 1], [], []>, precision = #tpu.contract_precision<fp32>} : vector<8x64xf32>, vector<64x16xf32>, vector<8x16xf32> -> vector<8x16xf32>
    %10 = vector.broadcast %3 : vector<1x16xf32> to vector<8x16xf32>
    %11 = arith.addf %9, %10 : vector<8x16xf32>
    %c0_7 = arith.constant 0 : index
    %c0_8 = arith.constant 0 : index
    %12 = vector.load %arg2[%c0_7, %c0_8] : memref<8x16xf32, #tpu.memory_space<vmem>>, vector<8x16xf32>
    tpu.vector_store %arg2[%c0_7, %c0_8], %11 {strides = array<i32>} : memref<8x16xf32, #tpu.memory_space<vmem>>, vector<8x16xf32>,
    return
  }
}

</mosaic_0001>

<llo_original>
// kernel: tpu_custom_call.1
$region0: #{tpu_custom_call.1}
  #allocation0 [shape = 'u32[]', space=smem, size = 0x4, offset = 0x4, fixed_abs, tag = 'smem constant byte address 0x4 - core index']
  #allocation1 [shape = 'u32[144,128]{1,0:T(1,128)}', space=vmem, size = 0x12000, scoped, tag = 'internal scratch']
  %s0 = inlined_call_operand.vmem [shape: f32[8,32], index: 0, kind: input, shape index: {}]
  %s1 = inlined_call_operand.vmem [shape: f32[128,64], index: 1, kind: input, shape index: {}]
  %s2 = inlined_call_operand.hbm [shape: f32[8,16], index: 2, kind: output, shape index: {}]
  %s3 = sld [smem:[#allocation0]]
  $region18: #{tpu_custom_call.1} parent=0
    _
  %s5 = ssub.s32 1, %s3
  %s6 = scalar_select 0, %s5, %s3
  $region1: #{tpu_custom_call.1} parent=0
    #allocation2 [shape = 'u8[4096]{0}', space=vmem, size = 0x1000, scoped, tag = 'output window, operand 0, single buffered']
    #allocation3 [shape = 's32[1]{0}', space=sflag, size = 0x4, scoped, tag = 'scoped memory for tpu_custom_call.1']
    %7 = vsyncpa [#allocation3], 0
    // Predicated region
    $region2: #{tpu_custom_call.1} parent=1 // pred_check
      _
    $region3: #{tpu_custom_call.1} parent=1 // pred_check_branch
      %9 = sbr.rel (0) target = $region5
    $region4: #{tpu_custom_call.1} parent=1 // pred_region
      _
    $region5: #{tpu_custom_call.1} parent=1 // pred_fallthru
      _
    // Predicated region
    $region6: #{tpu_custom_call.1} parent=1 // pred_check
      _
    $region7: #{tpu_custom_call.1} parent=1 // pred_check_branch
      %11 = sbr.rel (0) target = $region9
    $region8: #{tpu_custom_call.1} parent=1 // pred_region
      _
    $region9: #{tpu_custom_call.1} parent=1 // pred_fallthru
      _
    %v12 = vld [vmem:[%s1] sm:$0xff]
    %v13 = vld [vmem:[%s1 + $0x8] sm:$0xff]
    %v14 = vld [vmem:[%s1 + $0x10] sm:$0xff]
    %v15 = vld [vmem:[%s1 + $0x18] sm:$0xff]
    %v16 = vld [vmem:[%s1 + $0x20] sm:$0x1]
    %v17 = vld [vmem:[%s1 + $0x30] sm:$0xff]
    %v18 = vld [vmem:[%s1 + $0x38] sm:$0xff]
    %v19 = vld [vmem:[%s1 + $0x40] sm:$0xff]
    %v20 = vld [vmem:[%s1 + $0x48] sm:$0xff]
    %v21 = vld [vmem:[%s1 + $0x50] sm:$0xff]
    %v22 = vld [vmem:[%s1 + $0x58] sm:$0xff]
    %v23 = vld [vmem:[%s1 + $0x60] sm:$0xff]
    %v24 = vld [vmem:[%s1 + $0x68] sm:$0xff]
    %v25 = vld [vmem:[%s1 + $0x70] sm:$0x1]
    %v26 = vld [vmem:[%s0] sm:$0xff]
    %v27 = vlaneseq
    %v28 = vshrl.u32 %v27, 7
    %v29 = vsub.s32 0, %v28
    %v30 = vrot.slane %v16, %v29
    %vm31 = vcmask 261120
    %v33 = vsel %vm31, %v26, 0
    %35 = vmatprep.subr.mxu0 0.0
    %v36 = vand.u32 %v12, 4294901760
    %37 = vmatpush1.msra.mxu0 %v36
    %38 = vmatprep.subr.mxu0 0.0
    %v39 = vand.u32 %v13, 4294901760
    %40 = vmatpush1.msra.mxu0 %v39
    %41 = vmatprep.subr.mxu0 0.0
    %v42 = vand.u32 %v14, 4294901760
    %43 = vmatpush1.msra.mxu0 %v42
    %44 = vmatprep.subr.mxu0 0.0
    %v45 = vand.u32 %v15, 4294901760
    %46 = vmatpush1.msra.mxu0 %v45
    %47 = vmatprep.subr.mxu0 0.0
    %48 = vmatpush1.msra.mxu0 0.0
    %49 = vmatprep.subr.mxu0 0.0
    %50 = vmatpush1.msra.mxu0 0.0
    %51 = vmatprep.subr.mxu0 0.0
    %52 = vmatpush1.msra.mxu0 0.0
    %53 = vmatprep.subr.mxu0 0.0
    %54 = vmatpush1.msra.mxu0 0.0
    %55 = vmatprep.subr.mxu0 0.0
    %56 = vmatpush1.msra.mxu0 0.0
    %57 = vmatprep.subr.mxu0 0.0
    %58 = vmatpush1.msra.mxu0 0.0
    %59 = vmatprep.subr.mxu0 0.0
    %60 = vmatpush1.msra.mxu0 0.0
    %61 = vmatprep.subr.mxu0 0.0
    %62 = vmatpush1.msra.mxu0 0.0
    %63 = vmatprep.subr.mxu0 0.0
    %64 = vmatpush1.msra.mxu0 0.0
    %65 = vmatprep.subr.mxu0 0.0
    %66 = vmatpush1.msra.mxu0 0.0
    %67 = vmatprep.subr.mxu0 0.0
    %68 = vmatpush1.msra.mxu0 0.0
    %69 = vmatprep.subr.mxu0 0.0
    %70 = vmatpush1.msra.mxu0 0.0
    %71 = vmatprep.subr.mxu0 0.0
    %72 = vmatpush1.msra.mxu0 0.0
    %73 = vmatprep.subr.mxu0 0.0
    %74 = vmatpush1.msra.mxu0 0.0
    %75 = vmatprep.subr.mxu0 0.0
    %76 = vmatpush1.msra.mxu0 0.0
    %77 = vmatprep.subr.mxu0 0.0
    %78 = vmatpush1.msra.mxu0 0.0
    %79 = vmatprep.subr.mxu0 0.0
    %80 = vmatpush1.msra.mxu0 0.0
    %81 = vmatprep.subr.mxu0 0.0
    %82 = vmatpush1.msra.mxu0 0.0
    %83 = vmatprep.subr.mxu0 0.0
    %84 = vmatpush1.msra.mxu0 0.0
    %85 = vmatprep.subr.mxu0 0.0
    %86 = vmatpush1.msra.mxu0 0.0
    %87 = vmatprep.subr.mxu0 0.0
    %88 = vmatpush1.msra.mxu0 0.0
    %89 = vmatprep.subr.mxu0 0.0
    %90 = vmatpush1.msra.mxu0 0.0
    %91 = vmatprep.subr.mxu0 0.0
    %92 = vmatpush1.msra.mxu0 0.0
    %93 = vmatprep.subr.mxu0 0.0
    %94 = vmatpush1.msra.mxu0 0.0
    %95 = vmatprep.subr.mxu0 0.0
    %96 = vmatpush1.msra.mxu0 0.0
    %97 = vmatprep.subr.mxu0 0.0
    %98 = vmatpush1.msra.mxu0 0.0
    %99 = vmatprep.subr.mxu0 0.0
    %100 = vmatpush1.msra.mxu0 0.0
    %101 = vmatprep.subr.mxu0 0.0
    %102 = vmatpush1.msra.mxu0 0.0
    %103 = vmatprep.mubr.f32.mxu0 0.0
    %v104 = vand.u32 %v33, 4294901760
    %v105 = vsub.f32 %v33, %v104
    %v106 = vand.u32 %v105, 4294901760
    %v107 = vsub.f32 %v105, %v106
    %v108 = vand.u32 %v107, 4294901760
    %109 = vmatmul.mubr.f32.gmra.mrb[0].mxu0 %v108
    %v110 = vpop.f32.mrb[0].mxu0
    %v111 = vadd.f32 %v30, %v110
    %v112 = vpop.f32.mrb[0].mxu0
    %113 = vdwg.mxu0
    %114 = vmatprep.subr.mxu0 0.0
    %v115 = vand.u32 %v12, 4294901760
    %v116 = vsub.f32 %v12, %v115
    %v117 = vand.u32 %v116, 4294901760
    %v118 = vsub.f32 %v116, %v117
    %v119 = vand.u32 %v118, 4294901760
    %120 = vmatpush1.msra.mxu0 %v119
    %121 = vmatprep.subr.mxu0 0.0
    %v122 = vand.u32 %v13, 4294901760
    %v123 = vsub.f32 %v13, %v122
    %v124 = vand.u32 %v123, 4294901760
    %v125 = vsub.f32 %v123, %v124
    %v126 = vand.u32 %v125, 4294901760
    %127 = vmatpush1.msra.mxu0 %v126
    %128 = vmatprep.subr.mxu0 0.0
    %v129 = vand.u32 %v14, 4294901760
    %v130 = vsub.f32 %v14, %v129
    %v131 = vand.u32 %v130, 4294901760
    %v132 = vsub.f32 %v130, %v131
    %v133 = vand.u32 %v132, 4294901760
    %134 = vmatpush1.msra.mxu0 %v133
    %135 = vmatprep.subr.mxu0 0.0
    %v136 = vand.u32 %v15, 4294901760
    %v137 = vsub.f32 %v15, %v136
    %v138 = vand.u32 %v137, 4294901760
    %v139 = vsub.f32 %v137, %v138
    %v140 = vand.u32 %v139, 4294901760
    %141 = vmatpush1.msra.mxu0 %v140
    %142 = vmatprep.subr.mxu0 0.0
    %143 = vmatpush1.msra.mxu0 0.0
    %144 = vmatprep.subr.mxu0 0.0
    %145 = vmatpush1.msra.mxu0 0.0
    %146 = vmatprep.subr.mxu0 0.0
    %147 = vmatpush1.msra.mxu0 0.0
    %148 = vmatprep.subr.mxu0 0.0
    %149 = vmatpush1.msra.mxu0 0.0
    %150 = vmatprep.subr.mxu0 0.0
    %151 = vmatpush1.msra.mxu0 0.0
    %152 = vmatprep.subr.mxu0 0.0
    %153 = vmatpush1.msra.mxu0 0.0
    %154 = vmatprep.subr.mxu0 0.0
    %155 = vmatpush1.msra.mxu0 0.0
    %156 = vmatprep.subr.mxu0 0.0
    %157 = vmatpush1.msra.mxu0 0.0
    %158 = vmatprep.subr.mxu0 0.0
    %159 = vmatpush1.msra.mxu0 0.0
    %160 = vmatprep.subr.mxu0 0.0
    %161 = vmatpush1.msra.mxu0 0.0
    %162 = vmatprep.subr.mxu0 0.0
    %163 = vmatpush1.msra.mxu0 0.0
    %164 = vmatprep.subr.mxu0 0.0
    %165 = vmatpush1.msra.mxu0 0.0
    %166 = vmatprep.subr.mxu0 0.0
    %167 = vmatpush1.msra.mxu0 0.0
    %168 = vmatprep.subr.mxu0 0.0
    %169 = vmatpush1.msra.mxu0 0.0
    %170 = vmatprep.subr.mxu0 0.0
    %171 = vmatpush1.msra.mxu0 0.0
    %172 = vmatprep.subr.mxu0 0.0
    %173 = vmatpush1.msra.mxu0 0.0
    %174 = vmatprep.subr.mxu0 0.0
    %175 = vmatpush1.msra.mxu0 0.0
    %176 = vmatprep.subr.mxu0 0.0
    %177 = vmatpush1.msra.mxu0 0.0
    %178 = vmatprep.subr.mxu0 0.0
    %179 = vmatpush1.msra.mxu0 0.0
    %180 = vmatprep.subr.mxu0 0.0
    %181 = vmatpush1.msra.mxu0 0.0
    %182 = vmatprep.subr.mxu0 0.0
    %183 = vmatpush1.msra.mxu0 0.0
    %184 = vmatprep.subr.mxu0 0.0
    %185 = vmatpush1.msra.mxu0 0.0
    %186 = vmatprep.subr.mxu0 0.0
    %187 = vmatpush1.msra.mxu0 0.0
    %188 = vmatprep.subr.mxu0 0.0
    %189 = vmatpush1.msra.mxu0 0.0
    %190 = vmatprep.subr.mxu0 0.0
    %191 = vmatpush1.msra.mxu0 0.0
    %192 = vmatprep.subr.mxu0 0.0
    %193 = vmatpush1.msra.mxu0 0.0
    %194 = vmatprep.subr.mxu0 0.0
    %195 = vmatpush1.msra.mxu0 0.0
    %196 = vmatprep.subr.mxu0 0.0
    %197 = vmatpush1.msra.mxu0 0.0
    %198 = vmatprep.mubr.f32.mxu0 0.0
    %v199 = vand.u32 %v33, 4294901760
    %200 = vmatmul.mubr.f32.gmra.mrb[0].mxu0 %v199
    %v201 = vpop.f32.mrb[0].mxu0
    %v202 = vadd.f32 %v111, %v201
    %v203 = vpop.f32.mrb[0].mxu0
    %204 = vdwg.mxu0
    %205 = vmatprep.subr.mxu0 0.0
    %v206 = vand.u32 %v12, 4294901760
    %v207 = vsub.f32 %v12, %v206
    %208 = vmatpush1.msra.mxu0 %v207
    %209 = vmatprep.subr.mxu0 0.0
    %v210 = vand.u32 %v13, 4294901760
    %v211 = vsub.f32 %v13, %v210
    %212 = vmatpush1.msra.mxu0 %v211
    %213 = vmatprep.subr.mxu0 0.0
    %v214 = vand.u32 %v14, 4294901760
    %v215 = vsub.f32 %v14, %v214
    %216 = vmatpush1.msra.mxu0 %v215
    %217 = vmatprep.subr.mxu0 0.0
    %v218 = vand.u32 %v15, 4294901760
    %v219 = vsub.f32 %v15, %v218
    %220 = vmatpush1.msra.mxu0 %v219
    %221 = vmatprep.subr.mxu0 0.0
    %222 = vmatpush1.msra.mxu0 0.0
    %223 = vmatprep.subr.mxu0 0.0
    %224 = vmatpush1.msra.mxu0 0.0
    %225 = vmatprep.subr.mxu0 0.0
    %226 = vmatpush1.msra.mxu0 0.0
    %227 = vmatprep.subr.mxu0 0.0
    %228 = vmatpush1.msra.mxu0 0.0
    %229 = vmatprep.subr.mxu0 0.0
    %230 = vmatpush1.msra.mxu0 0.0
    %231 = vmatprep.subr.mxu0 0.0
    %232 = vmatpush1.msra.mxu0 0.0
    %233 = vmatprep.subr.mxu0 0.0
    %234 = vmatpush1.msra.mxu0 0.0
    %235 = vmatprep.subr.mxu0 0.0
    %236 = vmatpush1.msra.mxu0 0.0
    %237 = vmatprep.subr.mxu0 0.0
    %238 = vmatpush1.msra.mxu0 0.0
    %239 = vmatprep.subr.mxu0 0.0
    %240 = vmatpush1.msra.mxu0 0.0
    %241 = vmatprep.subr.mxu0 0.0
    %242 = vmatpush1.msra.mxu0 0.0
    %243 = vmatprep.subr.mxu0 0.0
    %244 = vmatpush1.msra.mxu0 0.0
    %245 = vmatprep.subr.mxu0 0.0
    %246 = vmatpush1.msra.mxu0 0.0
    %247 = vmatprep.subr.mxu0 0.0
    %248 = vmatpush1.msra.mxu0 0.0
    %249 = vmatprep.subr.mxu0 0.0
    %250 = vmatpush1.msra.mxu0 0.0
    %251 = vmatprep.subr.mxu0 0.0
    %252 = vmatpush1.msra.mxu0 0.0
    %253 = vmatprep.subr.mxu0 0.0
    %254 = vmatpush1.msra.mxu0 0.0
    %255 = vmatprep.subr.mxu0 0.0
    %256 = vmatpush1.msra.mxu0 0.0
    %257 = vmatprep.subr.mxu0 0.0
    %258 = vmatpush1.msra.mxu0 0.0
    %259 = vmatprep.subr.mxu0 0.0
    %260 = vmatpush1.msra.mxu0 0.0
    %261 = vmatprep.subr.mxu0 0.0
    %262 = vmatpush1.msra.mxu0 0.0
    %263 = vmatprep.subr.mxu0 0.0
    %264 = vmatpush1.msra.mxu0 0.0
    %265 = vmatprep.subr.mxu0 0.0
    %266 = vmatpush1.msra.mxu0 0.0
    %267 = vmatprep.subr.mxu0 0.0
    %268 = vmatpush1.msra.mxu0 0.0
    %269 = vmatprep.subr.mxu0 0.0
    %270 = vmatpush1.msra.mxu0 0.0
    %271 = vmatprep.subr.mxu0 0.0
    %272 = vmatpush1.msra.mxu0 0.0
    %273 = vmatprep.subr.mxu0 0.0
    %274 = vmatpush1.msra.mxu0 0.0
    %275 = vmatprep.subr.mxu0 0.0
    %276 = vmatpush1.msra.mxu0 0.0
    %277 = vmatprep.mubr.f32.mxu0 0.0
    %v278 = vand.u32 %v33, 4294901760
    %v279 = vsub.f32 %v33, %v278
    %280 = vmatmul.mubr.f32.gmra.mrb[0].mxu0 %v279
    %v281 = vpop.f32.mrb[0].mxu0
    %v282 = vadd.f32 %v202, %v281
    %v283 = vpop.f32.mrb[0].mxu0
    %284 = vdwg.mxu0
    %285 = vmatprep.subr.mxu0 0.0
    %v286 = vand.u32 %v12, 4294901760
    %287 = vmatpush1.msra.mxu0 %v286
    %288 = vmatprep.subr.mxu0 0.0
    %v289 = vand.u32 %v13, 4294901760
    %290 = vmatpush1.msra.mxu0 %v289
    %291 = vmatprep.subr.mxu0 0.0
    %v292 = vand.u32 %v14, 4294901760
    %293 = vmatpush1.msra.mxu0 %v292
    %294 = vmatprep.subr.mxu0 0.0
    %v295 = vand.u32 %v15, 4294901760
    %296 = vmatpush1.msra.mxu0 %v295
    %297 = vmatprep.subr.mxu0 0.0
    %298 = vmatpush1.msra.mxu0 0.0
    %299 = vmatprep.subr.mxu0 0.0
    %300 = vmatpush1.msra.mxu0 0.0
    %301 = vmatprep.subr.mxu0 0.0
    %302 = vmatpush1.msra.mxu0 0.0
    %303 = vmatprep.subr.mxu0 0.0
    %304 = vmatpush1.msra.mxu0 0.0
    %305 = vmatprep.subr.mxu0 0.0
    %306 = vmatpush1.msra.mxu0 0.0
    %307 = vmatprep.subr.mxu0 0.0
    %308 = vmatpush1.msra.mxu0 0.0
    %309 = vmatprep.subr.mxu0 0.0
    %310 = vmatpush1.msra.mxu0 0.0
    %311 = vmatprep.subr.mxu0 0.0
    %312 = vmatpush1.msra.mxu0 0.0
    %313 = vmatprep.subr.mxu0 0.0
    %314 = vmatpush1.msra.mxu0 0.0
    %315 = vmatprep.subr.mxu0 0.0
    %316 = vmatpush1.msra.mxu0 0.0
    %317 = vmatprep.subr.mxu0 0.0
    %318 = vmatpush1.msra.mxu0 0.0
    %319 = vmatprep.subr.mxu0 0.0
    %320 = vmatpush1.msra.mxu0 0.0
    %321 = vmatprep.subr.mxu0 0.0
    %322 = vmatpush1.msra.mxu0 0.0
    %323 = vmatprep.subr.mxu0 0.0
    %324 = vmatpush1.msra.mxu0 0.0
    %325 = vmatprep.subr.mxu0 0.0
    %326 = vmatpush1.msra.mxu0 0.0
    %327 = vmatprep.subr.mxu0 0.0
    %328 = vmatpush1.msra.mxu0 0.0
    %329 = vmatprep.subr.mxu0 0.0
    %330 = vmatpush1.msra.mxu0 0.0
    %331 = vmatprep.subr.mxu0 0.0
    %332 = vmatpush1.msra.mxu0 0.0
    %333 = vmatprep.subr.mxu0 0.0
    %334 = vmatpush1.msra.mxu0 0.0
    %335 = vmatprep.subr.mxu0 0.0
    %336 = vmatpush1.msra.mxu0 0.0
    %337 = vmatprep.subr.mxu0 0.0
    %338 = vmatpush1.msra.mxu0 0.0
    %339 = vmatprep.subr.mxu0 0.0
    %340 = vmatpush1.msra.mxu0 0.0
    %341 = vmatprep.subr.mxu0 0.0
    %342 = vmatpush1.msra.mxu0 0.0
    %343 = vmatprep.subr.mxu0 0.0
    %344 = vmatpush1.msra.mxu0 0.0
    %345 = vmatprep.subr.mxu0 0.0
    %346 = vmatpush1.msra.mxu0 0.0
    %347 = vmatprep.subr.mxu0 0.0
    %348 = vmatpush1.msra.mxu0 0.0
    %349 = vmatprep.subr.mxu0 0.0
    %350 = vmatpush1.msra.mxu0 0.0
    %351 = vmatprep.subr.mxu0 0.0
    %352 = vmatpush1.msra.mxu0 0.0
    %353 = vmatprep.mubr.f32.mxu0 0.0
    %v354 = vand.u32 %v33, 4294901760
    %v355 = vsub.f32 %v33, %v354
    %v356 = vand.u32 %v355, 4294901760
    %357 = vmatmul.mubr.f32.gmra.mrb[0].mxu0 %v356
    %v358 = vpop.f32.mrb[0].mxu0
    %v359 = vadd.f32 %v282, %v358
    %v360 = vpop.f32.mrb[0].mxu0
    %361 = vdwg.mxu0
    %362 = vmatprep.subr.mxu0 0.0
    %v363 = vand.u32 %v12, 4294901760
    %v364 = vsub.f32 %v12, %v363
    %v365 = vand.u32 %v364, 4294901760
    %366 = vmatpush1.msra.mxu0 %v365
    %367 = vmatprep.subr.mxu0 0.0
    %v368 = vand.u32 %v13, 4294901760
    %v369 = vsub.f32 %v13, %v368
    %v370 = vand.u32 %v369, 4294901760
    %371 = vmatpush1.msra.mxu0 %v370
    %372 = vmatprep.subr.mxu0 0.0
    %v373 = vand.u32 %v14, 4294901760
    %v374 = vsub.f32 %v14, %v373
    %v375 = vand.u32 %v374, 4294901760
    %376 = vmatpush1.msra.mxu0 %v375
    %377 = vmatprep.subr.mxu0 0.0
    %v378 = vand.u32 %v15, 4294901760
    %v379 = vsub.f32 %v15, %v378
    %v380 = vand.u32 %v379, 4294901760
    %381 = vmatpush1.msra.mxu0 %v380
    %382 = vmatprep.subr.mxu0 0.0
    %383 = vmatpush1.msra.mxu0 0.0
    %384 = vmatprep.subr.mxu0 0.0
    %385 = vmatpush1.msra.mxu0 0.0
    %386 = vmatprep.subr.mxu0 0.0
    %387 = vmatpush1.msra.mxu0 0.0
    %388 = vmatprep.subr.mxu0 0.0
    %389 = vmatpush1.msra.mxu0 0.0
    %390 = vmatprep.subr.mxu0 0.0
    %391 = vmatpush1.msra.mxu0 0.0
    %392 = vmatprep.subr.mxu0 0.0
    %393 = vmatpush1.msra.mxu0 0.0
    %394 = vmatprep.subr.mxu0 0.0
    %395 = vmatpush1.msra.mxu0 0.0
    %396 = vmatprep.subr.mxu0 0.0
    %397 = vmatpush1.msra.mxu0 0.0
    %398 = vmatprep.subr.mxu0 0.0
    %399 = vmatpush1.msra.mxu0 0.0
    %400 = vmatprep.subr.mxu0 0.0
    %401 = vmatpush1.msra.mxu0 0.0
    %402 = vmatprep.subr.mxu0 0.0
    %403 = vmatpush1.msra.mxu0 0.0
    %404 = vmatprep.subr.mxu0 0.0
    %405 = vmatpush1.msra.mxu0 0.0
    %406 = vmatprep.subr.mxu0 0.0
    %407 = vmatpush1.msra.mxu0 0.0
    %408 = vmatprep.subr.mxu0 0.0
    %409 = vmatpush1.msra.mxu0 0.0
    %410 = vmatprep.subr.mxu0 0.0
    %411 = vmatpush1.msra.mxu0 0.0
    %412 = vmatprep.subr.mxu0 0.0
    %413 = vmatpush1.msra.mxu0 0.0
    %414 = vmatprep.subr.mxu0 0.0
    %415 = vmatpush1.msra.mxu0 0.0
    %416 = vmatprep.subr.mxu0 0.0
    %417 = vmatpush1.msra.mxu0 0.0
    %418 = vmatprep.subr.mxu0 0.0
    %419 = vmatpush1.msra.mxu0 0.0
    %420 = vmatprep.subr.mxu0 0.0
    %421 = vmatpush1.msra.mxu0 0.0
    %422 = vmatprep.subr.mxu0 0.0
    %423 = vmatpush1.msra.mxu0 0.0
    %424 = vmatprep.subr.mxu0 0.0
    %425 = vmatpush1.msra.mxu0 0.0
    %426 = vmatprep.subr.mxu0 0.0
    %427 = vmatpush1.msra.mxu0 0.0
    %428 = vmatprep.subr.mxu0 0.0
    %429 = vmatpush1.msra.mxu0 0.0
    %430 = vmatprep.subr.mxu0 0.0
    %431 = vmatpush1.msra.mxu0 0.0
    %432 = vmatprep.subr.mxu0 0.0
    %433 = vmatpush1.msra.mxu0 0.0
    %434 = vmatprep.subr.mxu0 0.0
    %435 = vmatpush1.msra.mxu0 0.0
    %436 = vmatprep.subr.mxu0 0.0
    %437 = vmatpush1.msra.mxu0 0.0
    %438 = vmatprep.mubr.f32.mxu0 0.0
    %v439 = vand.u32 %v33, 4294901760
    %440 = vmatmul.mubr.f32.gmra.mrb[0].mxu0 %v439
    %v441 = vpop.f32.mrb[0].mxu0
    %v442 = vadd.f32 %v359, %v441
    %v443 = vpop.f32.mrb[0].mxu0
    %444 = vdwg.mxu0
    %445 = vmatprep.subr.mxu0 0.0
    %v446 = vand.u32 %v12, 4294901760
    %447 = vmatpush1.msra.mxu0 %v446
    %448 = vmatprep.subr.mxu0 0.0
    %v449 = vand.u32 %v13, 4294901760
    %450 = vmatpush1.msra.mxu0 %v449
    %451 = vmatprep.subr.mxu0 0.0
    %v452 = vand.u32 %v14, 4294901760
    %453 = vmatpush1.msra.mxu0 %v452
    %454 = vmatprep.subr.mxu0 0.0
    %v455 = vand.u32 %v15, 4294901760
    %456 = vmatpush1.msra.mxu0 %v455
    %457 = vmatprep.subr.mxu0 0.0
    %458 = vmatpush1.msra.mxu0 0.0
    %459 = vmatprep.subr.mxu0 0.0
    %460 = vmatpush1.msra.mxu0 0.0
    %461 = vmatprep.subr.mxu0 0.0
    %462 = vmatpush1.msra.mxu0 0.0
    %463 = vmatprep.subr.mxu0 0.0
    %464 = vmatpush1.msra.mxu0 0.0
    %465 = vmatprep.subr.mxu0 0.0
    %466 = vmatpush1.msra.mxu0 0.0
    %467 = vmatprep.subr.mxu0 0.0
    %468 = vmatpush1.msra.mxu0 0.0
    %469 = vmatprep.subr.mxu0 0.0
    %470 = vmatpush1.msra.mxu0 0.0
    %471 = vmatprep.subr.mxu0 0.0
    %472 = vmatpush1.msra.mxu0 0.0
    %473 = vmatprep.subr.mxu0 0.0
    %474 = vmatpush1.msra.mxu0 0.0
    %475 = vmatprep.subr.mxu0 0.0
    %476 = vmatpush1.msra.mxu0 0.0
    %477 = vmatprep.subr.mxu0 0.0
    %478 = vmatpush1.msra.mxu0 0.0
    %479 = vmatprep.subr.mxu0 0.0
    %480 = vmatpush1.msra.mxu0 0.0
    %481 = vmatprep.subr.mxu0 0.0
    %482 = vmatpush1.msra.mxu0 0.0
    %483 = vmatprep.subr.mxu0 0.0
    %484 = vmatpush1.msra.mxu0 0.0
    %485 = vmatprep.subr.mxu0 0.0
    %486 = vmatpush1.msra.mxu0 0.0
    %487 = vmatprep.subr.mxu0 0.0
    %488 = vmatpush1.msra.mxu0 0.0
    %489 = vmatprep.subr.mxu0 0.0
    %490 = vmatpush1.msra.mxu0 0.0
    %491 = vmatprep.subr.mxu0 0.0
    %492 = vmatpush1.msra.mxu0 0.0
    %493 = vmatprep.subr.mxu0 0.0
    %494 = vmatpush1.msra.mxu0 0.0
    %495 = vmatprep.subr.mxu0 0.0
    %496 = vmatpush1.msra.mxu0 0.0
    %497 = vmatprep.subr.mxu0 0.0
    %498 = vmatpush1.msra.mxu0 0.0
    %499 = vmatprep.subr.mxu0 0.0
    %500 = vmatpush1.msra.mxu0 0.0
    %501 = vmatprep.subr.mxu0 0.0
    %502 = vmatpush1.msra.mxu0 0.0
    %503 = vmatprep.subr.mxu0 0.0
    %504 = vmatpush1.msra.mxu0 0.0
    %505 = vmatprep.subr.mxu0 0.0
    %506 = vmatpush1.msra.mxu0 0.0
    %507 = vmatprep.subr.mxu0 0.0
    %508 = vmatpush1.msra.mxu0 0.0
    %509 = vmatprep.subr.mxu0 0.0
    %510 = vmatpush1.msra.mxu0 0.0
    %511 = vmatprep.subr.mxu0 0.0
    %512 = vmatpush1.msra.mxu0 0.0
    %513 = vmatprep.mubr.f32.mxu0 0.0
    %v514 = vand.u32 %v33, 4294901760
    %515 = vmatmul.mubr.f32.gmra.mrb[0].mxu0 %v514
    %v516 = vpop.f32.mrb[0].mxu0
    %v517 = vadd.f32 %v442, %v516
    %v518 = vpop.f32.mrb[0].mxu0
    %519 = vdwg.mxu0
    %v520 = vtanh.pop %v517
    %v521 = vlaneseq
    %v522 = vshrl.u32 %v521, 7
    %v523 = vsub.s32 0, %v522
    %v524 = vrot.slane %v25, %v523
    %vm525 = vcmask 523264
    %v527 = vsel %vm525, %v520, 0
    %529 = vmatprep.subr.mxu0 0.0
    %v530 = vand.u32 %v17, 4294901760
    %531 = vmatpush1.msra.mxu0 %v530
    %532 = vmatprep.subr.mxu0 0.0
    %v533 = vand.u32 %v18, 4294901760
    %534 = vmatpush1.msra.mxu0 %v533
    %535 = vmatprep.subr.mxu0 0.0
    %v536 = vand.u32 %v19, 4294901760
    %537 = vmatpush1.msra.mxu0 %v536
    %538 = vmatprep.subr.mxu0 0.0
    %v539 = vand.u32 %v20, 4294901760
    %540 = vmatpush1.msra.mxu0 %v539
    %541 = vmatprep.subr.mxu0 0.0
    %v542 = vand.u32 %v21, 4294901760
    %543 = vmatpush1.msra.mxu0 %v542
    %544 = vmatprep.subr.mxu0 0.0
    %v545 = vand.u32 %v22, 4294901760
    %546 = vmatpush1.msra.mxu0 %v545
    %547 = vmatprep.subr.mxu0 0.0
    %v548 = vand.u32 %v23, 4294901760
    %549 = vmatpush1.msra.mxu0 %v548
    %550 = vmatprep.subr.mxu0 0.0
    %v551 = vand.u32 %v24, 4294901760
    %552 = vmatpush1.msra.mxu0 %v551
    %553 = vmatprep.subr.mxu0 0.0
    %554 = vmatpush1.msra.mxu0 0.0
    %555 = vmatprep.subr.mxu0 0.0
    %556 = vmatpush1.msra.mxu0 0.0
    %557 = vmatprep.subr.mxu0 0.0
    %558 = vmatpush1.msra.mxu0 0.0
    %559 = vmatprep.subr.mxu0 0.0
    %560 = vmatpush1.msra.mxu0 0.0
    %561 = vmatprep.subr.mxu0 0.0
    %562 = vmatpush1.msra.mxu0 0.0
    %563 = vmatprep.subr.mxu0 0.0
    %564 = vmatpush1.msra.mxu0 0.0
    %565 = vmatprep.subr.mxu0 0.0
    %566 = vmatpush1.msra.mxu0 0.0
    %567 = vmatprep.subr.mxu0 0.0
    %568 = vmatpush1.msra.mxu0 0.0
    %569 = vmatprep.subr.mxu0 0.0
    %570 = vmatpush1.msra.mxu0 0.0
    %571 = vmatprep.subr.mxu0 0.0
    %572 = vmatpush1.msra.mxu0 0.0
    %573 = vmatprep.subr.mxu0 0.0
    %574 = vmatpush1.msra.mxu0 0.0
    %575 = vmatprep.subr.mxu0 0.0
    %576 = vmatpush1.msra.mxu0 0.0
    %577 = vmatprep.subr.mxu0 0.0
    %578 = vmatpush1.msra.mxu0 0.0
    %579 = vmatprep.subr.mxu0 0.0
    %580 = vmatpush1.msra.mxu0 0.0
    %581 = vmatprep.subr.mxu0 0.0
    %582 = vmatpush1.msra.mxu0 0.0
    %583 = vmatprep.subr.mxu0 0.0
    %584 = vmatpush1.msra.mxu0 0.0
    %585 = vmatprep.subr.mxu0 0.0
    %586 = vmatpush1.msra.mxu0 0.0
    %587 = vmatprep.subr.mxu0 0.0
    %588 = vmatpush1.msra.mxu0 0.0
    %589 = vmatprep.subr.mxu0 0.0
    %590 = vmatpush1.msra.mxu0 0.0
    %591 = vmatprep.subr.mxu0 0.0
    %592 = vmatpush1.msra.mxu0 0.0
    %593 = vmatprep.subr.mxu0 0.0
    %594 = vmatpush1.msra.mxu0 0.0
    %595 = vmatprep.subr.mxu0 0.0
    %596 = vmatpush1.msra.mxu0 0.0
    %597 = vmatprep.subr.mxu0 0.0
    %598 = vmatpush1.msra.mxu0 0.0
    %599 = vmatprep.subr.mxu0 0.0
    %600 = vmatpush1.msra.mxu0 0.0
    %601 = vmatprep.mubr.f32.mxu0 0.0
    %v602 = vand.u32 %v527, 4294901760
    %v603 = vsub.f32 %v527, %v602
    %v604 = vand.u32 %v603, 4294901760
    %v605 = vsub.f32 %v603, %v604
    %v606 = vand.u32 %v605, 4294901760
    %607 = vmatmul.mubr.f32.gmra.mrb[0].mxu0 %v606
    %v608 = vpop.f32.mrb[0].mxu0
    %v609 = vadd.f32 %v524, %v608
    %v610 = vpop.f32.mrb[0].mxu0
    %611 = vdwg.mxu0
    %612 = vmatprep.subr.mxu0 0.0
    %v613 = vand.u32 %v17, 4294901760
    %v614 = vsub.f32 %v17, %v613
    %v615 = vand.u32 %v614, 4294901760
    %v616 = vsub.f32 %v614, %v615
    %v617 = vand.u32 %v616, 4294901760
    %618 = vmatpush1.msra.mxu0 %v617
    %619 = vmatprep.subr.mxu0 0.0
    %v620 = vand.u32 %v18, 4294901760
    %v621 = vsub.f32 %v18, %v620
    %v622 = vand.u32 %v621, 4294901760
    %v623 = vsub.f32 %v621, %v622
    %v624 = vand.u32 %v623, 4294901760
    %625 = vmatpush1.msra.mxu0 %v624
    %626 = vmatprep.subr.mxu0 0.0
    %v627 = vand.u32 %v19, 4294901760
    %v628 = vsub.f32 %v19, %v627
    %v629 = vand.u32 %v628, 4294901760
    %v630 = vsub.f32 %v628, %v629
    %v631 = vand.u32 %v630, 4294901760
    %632 = vmatpush1.msra.mxu0 %v631
    %633 = vmatprep.subr.mxu0 0.0
    %v634 = vand.u32 %v20, 4294901760
    %v635 = vsub.f32 %v20, %v634
    %v636 = vand.u32 %v635, 4294901760
    %v637 = vsub.f32 %v635, %v636
    %v638 = vand.u32 %v637, 4294901760
    %639 = vmatpush1.msra.mxu0 %v638
    %640 = vmatprep.subr.mxu0 0.0
    %v641 = vand.u32 %v21, 4294901760
    %v642 = vsub.f32 %v21, %v641
    %v643 = vand.u32 %v642, 4294901760
    %v644 = vsub.f32 %v642, %v643
    %v645 = vand.u32 %v644, 4294901760
    %646 = vmatpush1.msra.mxu0 %v645
    %647 = vmatprep.subr.mxu0 0.0
    %v648 = vand.u32 %v22, 4294901760
    %v649 = vsub.f32 %v22, %v648
    %v650 = vand.u32 %v649, 4294901760
    %v651 = vsub.f32 %v649, %v650
    %v652 = vand.u32 %v651, 4294901760
    %653 = vmatpush1.msra.mxu0 %v652
    %654 = vmatprep.subr.mxu0 0.0
    %v655 = vand.u32 %v23, 4294901760
    %v656 = vsub.f32 %v23, %v655
    %v657 = vand.u32 %v656, 4294901760
    %v658 = vsub.f32 %v656, %v657
    %v659 = vand.u32 %v658, 4294901760
    %660 = vmatpush1.msra.mxu0 %v659
    %661 = vmatprep.subr.mxu0 0.0
    %v662 = vand.u32 %v24, 4294901760
    %v663 = vsub.f32 %v24, %v662
    %v664 = vand.u32 %v663, 4294901760
    %v665 = vsub.f32 %v663, %v664
    %v666 = vand.u32 %v665, 4294901760
    %667 = vmatpush1.msra.mxu0 %v666
    %668 = vmatprep.subr.mxu0 0.0
    %669 = vmatpush1.msra.mxu0 0.0
    %670 = vmatprep.subr.mxu0 0.0
    %671 = vmatpush1.msra.mxu0 0.0
    %672 = vmatprep.subr.mxu0 0.0
    %673 = vmatpush1.msra.mxu0 0.0
    %674 = vmatprep.subr.mxu0 0.0
    %675 = vmatpush1.msra.mxu0 0.0
    %676 = vmatprep.subr.mxu0 0.0
    %677 = vmatpush1.msra.mxu0 0.0
    %678 = vmatprep.subr.mxu0 0.0
    %679 = vmatpush1.msra.mxu0 0.0
    %680 = vmatprep.subr.mxu0 0.0
    %681 = vmatpush1.msra.mxu0 0.0
    %682 = vmatprep.subr.mxu0 0.0
    %683 = vmatpush1.msra.mxu0 0.0
    %684 = vmatprep.subr.mxu0 0.0
    %685 = vmatpush1.msra.mxu0 0.0
    %686 = vmatprep.subr.mxu0 0.0
    %687 = vmatpush1.msra.mxu0 0.0
    %688 = vmatprep.subr.mxu0 0.0
    %689 = vmatpush1.msra.mxu0 0.0
    %690 = vmatprep.subr.mxu0 0.0
    %691 = vmatpush1.msra.mxu0 0.0
    %692 = vmatprep.subr.mxu0 0.0
    %693 = vmatpush1.msra.mxu0 0.0
    %694 = vmatprep.subr.mxu0 0.0
    %695 = vmatpush1.msra.mxu0 0.0
    %696 = vmatprep.subr.mxu0 0.0
    %697 = vmatpush1.msra.mxu0 0.0
    %698 = vmatprep.subr.mxu0 0.0
    %699 = vmatpush1.msra.mxu0 0.0
    %700 = vmatprep.subr.mxu0 0.0
    %701 = vmatpush1.msra.mxu0 0.0
    %702 = vmatprep.subr.mxu0 0.0
    %703 = vmatpush1.msra.mxu0 0.0
    %704 = vmatprep.subr.mxu0 0.0
    %705 = vmatpush1.msra.mxu0 0.0
    %706 = vmatprep.subr.mxu0 0.0
    %707 = vmatpush1.msra.mxu0 0.0
    %708 = vmatprep.subr.mxu0 0.0
    %709 = vmatpush1.msra.mxu0 0.0
    %710 = vmatprep.subr.mxu0 0.0
    %711 = vmatpush1.msra.mxu0 0.0
    %712 = vmatprep.subr.mxu0 0.0
    %713 = vmatpush1.msra.mxu0 0.0
    %714 = vmatprep.subr.mxu0 0.0
    %715 = vmatpush1.msra.mxu0 0.0
    %716 = vmatprep.mubr.f32.mxu0 0.0
    %v717 = vand.u32 %v527, 4294901760
    %718 = vmatmul.mubr.f32.gmra.mrb[0].mxu0 %v717
    %v719 = vpop.f32.mrb[0].mxu0
    %v720 = vadd.f32 %v609, %v719
    %v721 = vpop.f32.mrb[0].mxu0
    %722 = vdwg.mxu0
    %723 = vmatprep.subr.mxu0 0.0
    %v724 = vand.u32 %v17, 4294901760
    %v725 = vsub.f32 %v17, %v724
    %726 = vmatpush1.msra.mxu0 %v725
    %727 = vmatprep.subr.mxu0 0.0
    %v728 = vand.u32 %v18, 4294901760
    %v729 = vsub.f32 %v18, %v728
    %730 = vmatpush1.msra.mxu0 %v729
    %731 = vmatprep.subr.mxu0 0.0
    %v732 = vand.u32 %v19, 4294901760
    %v733 = vsub.f32 %v19, %v732
    %734 = vmatpush1.msra.mxu0 %v733
    %735 = vmatprep.subr.mxu0 0.0
    %v736 = vand.u32 %v20, 4294901760
    %v737 = vsub.f32 %v20, %v736
    %738 = vmatpush1.msra.mxu0 %v737
    %739 = vmatprep.subr.mxu0 0.0
    %v740 = vand.u32 %v21, 4294901760
    %v741 = vsub.f32 %v21, %v740
    %742 = vmatpush1.msra.mxu0 %v741
    %743 = vmatprep.subr.mxu0 0.0
    %v744 = vand.u32 %v22, 4294901760
    %v745 = vsub.f32 %v22, %v744
    %746 = vmatpush1.msra.mxu0 %v745
    %747 = vmatprep.subr.mxu0 0.0
    %v748 = vand.u32 %v23, 4294901760
    %v749 = vsub.f32 %v23, %v748
    %750 = vmatpush1.msra.mxu0 %v749
    %751 = vmatprep.subr.mxu0 0.0
    %v752 = vand.u32 %v24, 4294901760
    %v753 = vsub.f32 %v24, %v752
    %754 = vmatpush1.msra.mxu0 %v753
    %755 = vmatprep.subr.mxu0 0.0
    %756 = vmatpush1.msra.mxu0 0.0
    %757 = vmatprep.subr.mxu0 0.0
    %758 = vmatpush1.msra.mxu0 0.0
    %759 = vmatprep.subr.mxu0 0.0
    %760 = vmatpush1.msra.mxu0 0.0
    %761 = vmatprep.subr.mxu0 0.0
    %762 = vmatpush1.msra.mxu0 0.0
    %763 = vmatprep.subr.mxu0 0.0
    %764 = vmatpush1.msra.mxu0 0.0
    %765 = vmatprep.subr.mxu0 0.0
    %766 = vmatpush1.msra.mxu0 0.0
    %767 = vmatprep.subr.mxu0 0.0
    %768 = vmatpush1.msra.mxu0 0.0
    %769 = vmatprep.subr.mxu0 0.0
    %770 = vmatpush1.msra.mxu0 0.0
    %771 = vmatprep.subr.mxu0 0.0
    %772 = vmatpush1.msra.mxu0 0.0
    %773 = vmatprep.subr.mxu0 0.0
    %774 = vmatpush1.msra.mxu0 0.0
    %775 = vmatprep.subr.mxu0 0.0
    %776 = vmatpush1.msra.mxu0 0.0
    %777 = vmatprep.subr.mxu0 0.0
    %778 = vmatpush1.msra.mxu0 0.0
    %779 = vmatprep.subr.mxu0 0.0
    %780 = vmatpush1.msra.mxu0 0.0
    %781 = vmatprep.subr.mxu0 0.0
    %782 = vmatpush1.msra.mxu0 0.0
    %783 = vmatprep.subr.mxu0 0.0
    %784 = vmatpush1.msra.mxu0 0.0
    %785 = vmatprep.subr.mxu0 0.0
    %786 = vmatpush1.msra.mxu0 0.0
    %787 = vmatprep.subr.mxu0 0.0
    %788 = vmatpush1.msra.mxu0 0.0
    %789 = vmatprep.subr.mxu0 0.0
    %790 = vmatpush1.msra.mxu0 0.0
    %791 = vmatprep.subr.mxu0 0.0
    %792 = vmatpush1.msra.mxu0 0.0
    %793 = vmatprep.subr.mxu0 0.0
    %794 = vmatpush1.msra.mxu0 0.0
    %795 = vmatprep.subr.mxu0 0.0
    %796 = vmatpush1.msra.mxu0 0.0
    %797 = vmatprep.subr.mxu0 0.0
    %798 = vmatpush1.msra.mxu0 0.0
    %799 = vmatprep.subr.mxu0 0.0
    %800 = vmatpush1.msra.mxu0 0.0
    %801 = vmatprep.subr.mxu0 0.0
    %802 = vmatpush1.msra.mxu0 0.0
    %803 = vmatprep.mubr.f32.mxu0 0.0
    %v804 = vand.u32 %v527, 4294901760
    %v805 = vsub.f32 %v527, %v804
    %806 = vmatmul.mubr.f32.gmra.mrb[0].mxu0 %v805
    %v807 = vpop.f32.mrb[0].mxu0
    %v808 = vadd.f32 %v720, %v807
    %v809 = vpop.f32.mrb[0].mxu0
    %810 = vdwg.mxu0
    %811 = vmatprep.subr.mxu0 0.0
    %v812 = vand.u32 %v17, 4294901760
    %813 = vmatpush1.msra.mxu0 %v812
    %814 = vmatprep.subr.mxu0 0.0
    %v815 = vand.u32 %v18, 4294901760
    %816 = vmatpush1.msra.mxu0 %v815
    %817 = vmatprep.subr.mxu0 0.0
    %v818 = vand.u32 %v19, 4294901760
    %819 = vmatpush1.msra.mxu0 %v818
    %820 = vmatprep.subr.mxu0 0.0
    %v821 = vand.u32 %v20, 4294901760
    %822 = vmatpush1.msra.mxu0 %v821
    %823 = vmatprep.subr.mxu0 0.0
    %v824 = vand.u32 %v21, 4294901760
    %825 = vmatpush1.msra.mxu0 %v824
    %826 = vmatprep.subr.mxu0 0.0
    %v827 = vand.u32 %v22, 4294901760
    %828 = vmatpush1.msra.mxu0 %v827
    %829 = vmatprep.subr.mxu0 0.0
    %v830 = vand.u32 %v23, 4294901760
    %831 = vmatpush1.msra.mxu0 %v830
    %832 = vmatprep.subr.mxu0 0.0
    %v833 = vand.u32 %v24, 4294901760
    %834 = vmatpush1.msra.mxu0 %v833
    %835 = vmatprep.subr.mxu0 0.0
    %836 = vmatpush1.msra.mxu0 0.0
    %837 = vmatprep.subr.mxu0 0.0
    %838 = vmatpush1.msra.mxu0 0.0
    %839 = vmatprep.subr.mxu0 0.0
    %840 = vmatpush1.msra.mxu0 0.0
    %841 = vmatprep.subr.mxu0 0.0
    %842 = vmatpush1.msra.mxu0 0.0
    %843 = vmatprep.subr.mxu0 0.0
    %844 = vmatpush1.msra.mxu0 0.0
    %845 = vmatprep.subr.mxu0 0.0
    %846 = vmatpush1.msra.mxu0 0.0
    %847 = vmatprep.subr.mxu0 0.0
    %848 = vmatpush1.msra.mxu0 0.0
    %849 = vmatprep.subr.mxu0 0.0
    %850 = vmatpush1.msra.mxu0 0.0
    %851 = vmatprep.subr.mxu0 0.0
    %852 = vmatpush1.msra.mxu0 0.0
    %853 = vmatprep.subr.mxu0 0.0
    %854 = vmatpush1.msra.mxu0 0.0
    %855 = vmatprep.subr.mxu0 0.0
    %856 = vmatpush1.msra.mxu0 0.0
    %857 = vmatprep.subr.mxu0 0.0
    %858 = vmatpush1.msra.mxu0 0.0
    %859 = vmatprep.subr.mxu0 0.0
    %860 = vmatpush1.msra.mxu0 0.0
    %861 = vmatprep.subr.mxu0 0.0
    %862 = vmatpush1.msra.mxu0 0.0
    %863 = vmatprep.subr.mxu0 0.0
    %864 = vmatpush1.msra.mxu0 0.0
    %865 = vmatprep.subr.mxu0 0.0
    %866 = vmatpush1.msra.mxu0 0.0
    %867 = vmatprep.subr.mxu0 0.0
    %868 = vmatpush1.msra.mxu0 0.0
    %869 = vmatprep.subr.mxu0 0.0
    %870 = vmatpush1.msra.mxu0 0.0
    %871 = vmatprep.subr.mxu0 0.0
    %872 = vmatpush1.msra.mxu0 0.0
    %873 = vmatprep.subr.mxu0 0.0
    %874 = vmatpush1.msra.mxu0 0.0
    %875 = vmatprep.subr.mxu0 0.0
    %876 = vmatpush1.msra.mxu0 0.0
    %877 = vmatprep.subr.mxu0 0.0
    %878 = vmatpush1.msra.mxu0 0.0
    %879 = vmatprep.subr.mxu0 0.0
    %880 = vmatpush1.msra.mxu0 0.0
    %881 = vmatprep.subr.mxu0 0.0
    %882 = vmatpush1.msra.mxu0 0.0
    %883 = vmatprep.mubr.f32.mxu0 0.0
    %v884 = vand.u32 %v527, 4294901760
    %v885 = vsub.f32 %v527, %v884
    %v886 = vand.u32 %v885, 4294901760
    %887 = vmatmul.mubr.f32.gmra.mrb[0].mxu0 %v886
    %v888 = vpop.f32.mrb[0].mxu0
    %v889 = vadd.f32 %v808, %v888
    %v890 = vpop.f32.mrb[0].mxu0
    %891 = vdwg.mxu0
    %892 = vmatprep.subr.mxu0 0.0
    %v893 = vand.u32 %v17, 4294901760
    %v894 = vsub.f32 %v17, %v893
    %v895 = vand.u32 %v894, 4294901760
    %896 = vmatpush1.msra.mxu0 %v895
    %897 = vmatprep.subr.mxu0 0.0
    %v898 = vand.u32 %v18, 4294901760
    %v899 = vsub.f32 %v18, %v898
    %v900 = vand.u32 %v899, 4294901760
    %901 = vmatpush1.msra.mxu0 %v900
    %902 = vmatprep.subr.mxu0 0.0
    %v903 = vand.u32 %v19, 4294901760
    %v904 = vsub.f32 %v19, %v903
    %v905 = vand.u32 %v904, 4294901760
    %906 = vmatpush1.msra.mxu0 %v905
    %907 = vmatprep.subr.mxu0 0.0
    %v908 = vand.u32 %v20, 4294901760
    %v909 = vsub.f32 %v20, %v908
    %v910 = vand.u32 %v909, 4294901760
    %911 = vmatpush1.msra.mxu0 %v910
    %912 = vmatprep.subr.mxu0 0.0
    %v913 = vand.u32 %v21, 4294901760
    %v914 = vsub.f32 %v21, %v913
    %v915 = vand.u32 %v914, 4294901760
    %916 = vmatpush1.msra.mxu0 %v915
    %917 = vmatprep.subr.mxu0 0.0
    %v918 = vand.u32 %v22, 4294901760
    %v919 = vsub.f32 %v22, %v918
    %v920 = vand.u32 %v919, 4294901760
    %921 = vmatpush1.msra.mxu0 %v920
    %922 = vmatprep.subr.mxu0 0.0
    %v923 = vand.u32 %v23, 4294901760
    %v924 = vsub.f32 %v23, %v923
    %v925 = vand.u32 %v924, 4294901760
    %926 = vmatpush1.msra.mxu0 %v925
    %927 = vmatprep.subr.mxu0 0.0
    %v928 = vand.u32 %v24, 4294901760
    %v929 = vsub.f32 %v24, %v928
    %v930 = vand.u32 %v929, 4294901760
    %931 = vmatpush1.msra.mxu0 %v930
    %932 = vmatprep.subr.mxu0 0.0
    %933 = vmatpush1.msra.mxu0 0.0
    %934 = vmatprep.subr.mxu0 0.0
    %935 = vmatpush1.msra.mxu0 0.0
    %936 = vmatprep.subr.mxu0 0.0
    %937 = vmatpush1.msra.mxu0 0.0
    %938 = vmatprep.subr.mxu0 0.0
    %939 = vmatpush1.msra.mxu0 0.0
    %940 = vmatprep.subr.mxu0 0.0
    %941 = vmatpush1.msra.mxu0 0.0
    %942 = vmatprep.subr.mxu0 0.0
    %943 = vmatpush1.msra.mxu0 0.0
    %944 = vmatprep.subr.mxu0 0.0
    %945 = vmatpush1.msra.mxu0 0.0
    %946 = vmatprep.subr.mxu0 0.0
    %947 = vmatpush1.msra.mxu0 0.0
    %948 = vmatprep.subr.mxu0 0.0
    %949 = vmatpush1.msra.mxu0 0.0
    %950 = vmatprep.subr.mxu0 0.0
    %951 = vmatpush1.msra.mxu0 0.0
    %952 = vmatprep.subr.mxu0 0.0
    %953 = vmatpush1.msra.mxu0 0.0
    %954 = vmatprep.subr.mxu0 0.0
    %955 = vmatpush1.msra.mxu0 0.0
    %956 = vmatprep.subr.mxu0 0.0
    %957 = vmatpush1.msra.mxu0 0.0
    %958 = vmatprep.subr.mxu0 0.0
    %959 = vmatpush1.msra.mxu0 0.0
    %960 = vmatprep.subr.mxu0 0.0
    %961 = vmatpush1.msra.mxu0 0.0
    %962 = vmatprep.subr.mxu0 0.0
    %963 = vmatpush1.msra.mxu0 0.0
    %964 = vmatprep.subr.mxu0 0.0
    %965 = vmatpush1.msra.mxu0 0.0
    %966 = vmatprep.subr.mxu0 0.0
    %967 = vmatpush1.msra.mxu0 0.0
    %968 = vmatprep.subr.mxu0 0.0
    %969 = vmatpush1.msra.mxu0 0.0
    %970 = vmatprep.subr.mxu0 0.0
    %971 = vmatpush1.msra.mxu0 0.0
    %972 = vmatprep.subr.mxu0 0.0
    %973 = vmatpush1.msra.mxu0 0.0
    %974 = vmatprep.subr.mxu0 0.0
    %975 = vmatpush1.msra.mxu0 0.0
    %976 = vmatprep.subr.mxu0 0.0
    %977 = vmatpush1.msra.mxu0 0.0
    %978 = vmatprep.subr.mxu0 0.0
    %979 = vmatpush1.msra.mxu0 0.0
    %980 = vmatprep.mubr.f32.mxu0 0.0
    %v981 = vand.u32 %v527, 4294901760
    %982 = vmatmul.mubr.f32.gmra.mrb[0].mxu0 %v981
    %v983 = vpop.f32.mrb[0].mxu0
    %v984 = vadd.f32 %v889, %v983
    %v985 = vpop.f32.mrb[0].mxu0
    %986 = vdwg.mxu0
    %987 = vmatprep.subr.mxu0 0.0
    %v988 = vand.u32 %v17, 4294901760
    %989 = vmatpush1.msra.mxu0 %v988
    %990 = vmatprep.subr.mxu0 0.0
    %v991 = vand.u32 %v18, 4294901760
    %992 = vmatpush1.msra.mxu0 %v991
    %993 = vmatprep.subr.mxu0 0.0
    %v994 = vand.u32 %v19, 4294901760
    %995 = vmatpush1.msra.mxu0 %v994
    %996 = vmatprep.subr.mxu0 0.0
    %v997 = vand.u32 %v20, 4294901760
    %998 = vmatpush1.msra.mxu0 %v997
    %999 = vmatprep.subr.mxu0 0.0
    %v1000 = vand.u32 %v21, 4294901760
    %1001 = vmatpush1.msra.mxu0 %v1000
    %1002 = vmatprep.subr.mxu0 0.0
    %v1003 = vand.u32 %v22, 4294901760
    %1004 = vmatpush1.msra.mxu0 %v1003
    %1005 = vmatprep.subr.mxu0 0.0
    %v1006 = vand.u32 %v23, 4294901760
    %1007 = vmatpush1.msra.mxu0 %v1006
    %1008 = vmatprep.subr.mxu0 0.0
    %v1009 = vand.u32 %v24, 4294901760
    %1010 = vmatpush1.msra.mxu0 %v1009
    %1011 = vmatprep.subr.mxu0 0.0
    %1012 = vmatpush1.msra.mxu0 0.0
    %1013 = vmatprep.subr.mxu0 0.0
    %1014 = vmatpush1.msra.mxu0 0.0
    %1015 = vmatprep.subr.mxu0 0.0
    %1016 = vmatpush1.msra.mxu0 0.0
    %1017 = vmatprep.subr.mxu0 0.0
    %1018 = vmatpush1.msra.mxu0 0.0
    %1019 = vmatprep.subr.mxu0 0.0
    %1020 = vmatpush1.msra.mxu0 0.0
    %1021 = vmatprep.subr.mxu0 0.0
    %1022 = vmatpush1.msra.mxu0 0.0
    %1023 = vmatprep.subr.mxu0 0.0
    %1024 = vmatpush1.msra.mxu0 0.0
    %1025 = vmatprep.subr.mxu0 0.0
    %1026 = vmatpush1.msra.mxu0 0.0
    %1027 = vmatprep.subr.mxu0 0.0
    %1028 = vmatpush1.msra.mxu0 0.0
    %1029 = vmatprep.subr.mxu0 0.0
    %1030 = vmatpush1.msra.mxu0 0.0
    %1031 = vmatprep.subr.mxu0 0.0
    %1032 = vmatpush1.msra.mxu0 0.0
    %1033 = vmatprep.subr.mxu0 0.0
    %1034 = vmatpush1.msra.mxu0 0.0
    %1035 = vmatprep.subr.mxu0 0.0
    %1036 = vmatpush1.msra.mxu0 0.0
    %1037 = vmatprep.subr.mxu0 0.0
    %1038 = vmatpush1.msra.mxu0 0.0
    %1039 = vmatprep.subr.mxu0 0.0
    %1040 = vmatpush1.msra.mxu0 0.0
    %1041 = vmatprep.subr.mxu0 0.0
    %1042 = vmatpush1.msra.mxu0 0.0
    %1043 = vmatprep.subr.mxu0 0.0
    %1044 = vmatpush1.msra.mxu0 0.0
    %1045 = vmatprep.subr.mxu0 0.0
    %1046 = vmatpush1.msra.mxu0 0.0
    %1047 = vmatprep.subr.mxu0 0.0
    %1048 = vmatpush1.msra.mxu0 0.0
    %1049 = vmatprep.subr.mxu0 0.0
    %1050 = vmatpush1.msra.mxu0 0.0
    %1051 = vmatprep.subr.mxu0 0.0
    %1052 = vmatpush1.msra.mxu0 0.0
    %1053 = vmatprep.subr.mxu0 0.0
    %1054 = vmatpush1.msra.mxu0 0.0
    %1055 = vmatprep.subr.mxu0 0.0
    %1056 = vmatpush1.msra.mxu0 0.0
    %1057 = vmatprep.subr.mxu0 0.0
    %1058 = vmatpush1.msra.mxu0 0.0
    %1059 = vmatprep.mubr.f32.mxu0 0.0
    %v1060 = vand.u32 %v527, 4294901760
    %1061 = vmatmul.mubr.f32.gmra.mrb[0].mxu0 %v1060
    %v1062 = vpop.f32.mrb[0].mxu0
    %v1063 = vadd.f32 %v984, %v1062
    %v1064 = vpop.f32.mrb[0].mxu0
    %1065 = vdwg.mxu0
    %vm1066 = vcmask 130048
    %1067 = vst.msk [vmem:[#allocation2] sm:$0xff] %vm1066, %v1063
    // Predicated region
    $region10: #{tpu_custom_call.1} parent=1 // pred_check
      _
    $region11: #{tpu_custom_call.1} parent=1 // pred_check_branch
      %1069 = sbr.rel (0) target = $region13
    $region12: #{tpu_custom_call.1} parent=1 // pred_region
      %s1071 = ssub.s32 128, 128
      %1072 = vsyncadd [#allocation3], %s1071
      %s1074 = sshll.u32 [#allocation2], 4
      %s1075 = int_to_ptr.vmem [resolvable:$true] %s1074
      %1077 = dma.vmem_to_hbm [thread:$0]  %s1075, 128, %s2, [#allocation3]
    $region13: #{tpu_custom_call.1} parent=1 // pred_fallthru
      _
    // Predicated region
    $region14: #{tpu_custom_call.1} parent=1 // pred_check
      _
    $region15: #{tpu_custom_call.1} parent=1 // pred_check_branch
      %1079 = sbr.rel (0) target = $region17
    $region16: #{tpu_custom_call.1} parent=1 // pred_region
      %1080 = dma.done [#allocation3], 128
    $region17: #{tpu_custom_call.1} parent=1 // pred_fallthru
      _
    %1081 = vsyncpa [#allocation3], 1

</llo_original>
